<compile_context>
chip_gen: v7x
topology: tpu7x:2x2x1
jax: 0.10.0
libtpu: 0.0.40
codegen_flags: <defaults>
</compile_context>

<pallas_src>
import functools

import jax
import jax.numpy as jnp
from jax.experimental import pallas as pl
from jax.experimental.pallas import tpu as pltpu


def _round_up(x: int, m: int) -> int:
    return ((x + m - 1) // m) * m


def _kg_loss_kernel(tile_rel_ref, tile_nvalid_ref,
                    h_ref, pos_ref, neg_ref, r_ref, wr_ref,
                    kg_ref, l2_ref):
    """TransR loss partial sums for one relation-homogeneous tile.

    tile_rel / tile_nvalid : (num_tiles,) int32 SMEM scalar-prefetch arrays
    h/pos/neg              : (TB, E)  f32 gathered entity embeddings (grouped)
    r                      : (1,1,E)  f32 relation embedding of this tile
    wr                     : (1,E,E)  f32 W_R matrix of this tile's relation
    kg/l2 out              : (1,1,1)  f32 per-tile partial sums
    """
    i = pl.program_id(0)
    nvalid = tile_nvalid_ref[i]           # valid rows in this tile (0 => skip)

    @pl.when(nvalid == 0)
    def _():
        kg_ref[...] = jnp.zeros_like(kg_ref)
        l2_ref[...] = jnp.zeros_like(l2_ref)

    @pl.when(nvalid > 0)
    def _():
        tb = h_ref.shape[0]
        w = wr_ref[0]                     # (E, E)
        r = r_ref[0]                      # (1, E)

        h = h_ref[...]
        pos = pos_ref[...]
        neg = neg_ref[...]

        # Three dots against the same VMEM-resident RHS (no concat / slices).
        # NOTE: keep f32 MXU inputs here (E is small); cast to bf16 only if
        # E >= 128 and the matmul actually binds (v5e/v6e).
        mh = jnp.dot(h, w, preferred_element_type=jnp.float32)
        mp = jnp.dot(pos, w, preferred_element_type=jnp.float32)
        mn = jnp.dot(neg, w, preferred_element_type=jnp.float32)

        hr = mh + r                                              # (TB, E)
        pos_score = jnp.sum((hr - mp) ** 2, axis=1, keepdims=True)   # (TB, 1)
        neg_score = jnp.sum((hr - mn) ** 2, axis=1, keepdims=True)   # (TB, 1)
        diff = neg_score - pos_score
        # -F.logsigmoid(x) = max(-x, 0) + log(1 + exp(-|x|))   (stable form)
        kg_row = jnp.maximum(-diff, 0.0) + jnp.log(1.0 + jnp.exp(-jnp.abs(diff)))

        # _L2_loss_mean numerators: sum_e x^2 / 2 for the four regularized
        # tensors (r_embed is constant across the tile's rows).
        r_sq = jnp.sum(r * r, axis=1, keepdims=True)             # (1, 1)
        l2_row = 0.5 * (jnp.sum(mh * mh + mp * mp + mn * mn, axis=1,
                                keepdims=True) + r_sq)           # (TB, 1)

        # Mask the padded tail rows of this relation group.
        row_ids = jax.lax.broadcasted_iota(jnp.int32, (tb, 1), 0)
        maskf = (row_ids < nvalid).astype(jnp.float32)

        kg_ref[...] = jnp.sum(kg_row * maskf, axis=0, keepdims=True).reshape(1, 1, 1)
        l2_ref[...] = jnp.sum(l2_row * maskf, axis=0, keepdims=True).reshape(1, 1, 1)


@functools.partial(jax.jit, static_argnames=("block_b",))
def calc_kg_loss(entities, relations, W_R, kg_lambda,
                 h_idx, r_idx, pos_idx, neg_idx, *, block_b=None):
    """STKGRec.forward('calc_kg_loss', h, r, pos_t, neg_t)."""
    B = h_idx.shape[0]
    E = entities.shape[1]
    R = W_R.shape[0]

    # Batch tile: roughly one tile per relation group (caps group padding),
    # clamped to [8, 2048] and to the padded batch; always a multiple of 8.
    if block_b is None:
        block_b = min(2048, max(256, _round_up(-(-B // max(R, 1)), 8)))
    tb = max(8, min(_round_up(int(block_b), 8), _round_up(B, 8)))

    # Static capacity of the relation-grouped, per-group tile-padded layout.
    cap = _round_up(B, tb) + R * tb
    num_tiles = cap // tb

    h_idx = h_idx.astype(jnp.int32)
    r_idx = r_idx.astype(jnp.int32)
    pos_idx = pos_idx.astype(jnp.int32)
    neg_idx = neg_idx.astype(jnp.int32)

    # ---- group rows by relation (sorted, each group padded to tile size) ----
    order = jnp.argsort(r_idx)                                   # stable
    sorted_r = r_idx[order]
    counts = jnp.zeros((R,), jnp.int32).at[r_idx].add(1)
    padded_counts = ((counts + tb - 1) // tb) * tb
    group_start = jnp.concatenate(
        [jnp.zeros((1,), jnp.int32), jnp.cumsum(padded_counts)[:-1].astype(jnp.int32)])
    counts_excl = jnp.concatenate(
        [jnp.zeros((1,), jnp.int32), jnp.cumsum(counts)[:-1].astype(jnp.int32)])
    rank = jnp.arange(B, dtype=jnp.int32) - counts_excl[sorted_r]
    dest = group_start[sorted_r] + rank                          # (B,) unique slots

    def gather_scatter(idx):
        emb = entities[idx[order]]                               # (B, E)
        return jnp.zeros((cap, E), entities.dtype).at[dest].set(emb)

    h_g = gather_scatter(h_idx)
    pos_g = gather_scatter(pos_idx)
    neg_g = gather_scatter(neg_idx)

    # Per-tile relation id + number of valid rows (SMEM scalar prefetch).
    tile_start = jnp.arange(num_tiles, dtype=jnp.int32) * tb
    group_end = group_start + padded_counts
    tile_rel = jnp.sum((tile_start[:, None] >= group_end[None, :]).astype(jnp.int32),
                       axis=1)
    tile_rel = jnp.minimum(tile_rel, R - 1).astype(jnp.int32)
    off_in_group = tile_start - group_start[tile_rel]
    tile_nvalid = jnp.clip(counts[tile_rel] - off_in_group, 0, tb).astype(jnp.int32)

    rel_table = relations.reshape(R, 1, E)                       # (R, 1, E)

    emb_spec = pl.BlockSpec((tb, E), lambda i, rel, nv: (i, 0))
    rel_spec = pl.BlockSpec((1, 1, E), lambda i, rel, nv: (rel[i], 0, 0))
    wr_spec = pl.BlockSpec((1, E, E), lambda i, rel, nv: (rel[i], 0, 0))
    out_spec = pl.BlockSpec((1, 1, 1), lambda i, rel, nv: (i, 0, 0))

    kg_parts, l2_parts = pl.pallas_call(
        _kg_loss_kernel,
        out_shape=(jax.ShapeDtypeStruct((num_tiles, 1, 1), jnp.float32),
                   jax.ShapeDtypeStruct((num_tiles, 1, 1), jnp.float32)),
        grid_spec=pltpu.PrefetchScalarGridSpec(
            num_scalar_prefetch=2,
            grid=(num_tiles,),
            in_specs=[emb_spec, emb_spec, emb_spec, rel_spec, wr_spec],
            out_specs=(out_spec, out_spec)),
        compiler_params=pltpu.CompilerParams(
            dimension_semantics=("parallel",),
            vmem_limit_bytes=48 * 1024 * 1024),
    )(tile_rel, tile_nvalid, h_g, pos_g, neg_g, rel_table, W_R)

    # Final scalar reduction: mean == sum / B (padding contributes exactly 0).
    kg_loss = jnp.sum(kg_parts) / B
    l2_loss = jnp.sum(l2_parts) / B
    return kg_loss + kg_lambda * l2_loss


def _reference(entities, relations, W_R, kg_lambda, h_idx, r_idx, pos_idx, neg_idx):
    hp = jax.lax.Precision.HIGHEST
    r_embed = relations[r_idx]
    W_r = W_R[r_idx]
    h_embed = entities[h_idx]
    pos_t = entities[pos_idx]
    neg_t = entities[neg_idx]
    r_mul_h = jnp.einsum('be,bef->bf', h_embed, W_r, precision=hp)
    r_mul_pos = jnp.einsum('be,bef->bf', pos_t, W_r, precision=hp)
    r_mul_neg = jnp.einsum('be,bef->bf', neg_t, W_r, precision=hp)
    pos_score = jnp.sum((r_mul_h + r_embed - r_mul_pos) ** 2, axis=1)
    neg_score = jnp.sum((r_mul_h + r_embed - r_mul_neg) ** 2, axis=1)
    kg_loss = jnp.mean(-jax.nn.log_sigmoid(neg_score - pos_score))
    l2 = lambda x: jnp.mean(jnp.sum(x ** 2, axis=1) / 2.0)
    return kg_loss + kg_lambda * (l2(r_mul_h) + l2(r_embed) + l2(r_mul_pos) + l2(r_mul_neg))


if __name__ == "__main__":
    # Deterministic synthetic parameters (shapes implied by STKGRec.__init__).
    n_users, n_locs = 10, 20
    n_tim_rel, n_tim_dis_gap = 6, 5
    emb_size = 32          # args['hidden_size']
    kg_lambda = 1e-5       # args['kg_lambda']
    B = 20                 # kg_batch_size (not a multiple of the tile -> exercises padding)

    key = jax.random.PRNGKey(0)
    k1, k2, k3, k4 = jax.random.split(key, 4)
    entities = 0.1 * jax.random.normal(k1, (n_users + n_locs, emb_size), jnp.float32)
    relations = 0.1 * jax.random.normal(k2, (n_tim_rel + n_tim_dis_gap, emb_size), jnp.float32)
    W_R = 0.1 * jax.random.normal(k3, (n_tim_rel + n_tim_dis_gap, emb_size, emb_size), jnp.float32)

    kk = jax.random.split(k4, 4)
    h_idx = jax.random.randint(kk[0], (B,), 0, n_users + n_locs)
    r_idx = jax.random.randint(kk[1], (B,), 0, n_tim_rel + n_tim_dis_gap)
    pos_idx = jax.random.randint(kk[2], (B,), 0, n_users + n_locs)
    neg_idx = jax.random.randint(kk[3], (B,), 0, n_users + n_locs)

    ref = _reference(entities, relations, W_R, kg_lambda, h_idx, r_idx, pos_idx, neg_idx)

    # Small forced-tile path (exercises multiple tiles per relation group +
    # group padding + empty tiles).
    loss_tiled = calc_kg_loss(entities, relations, W_R, kg_lambda,
                              h_idx, r_idx, pos_idx, neg_idx, block_b=8)
    loss_tiled = jax.block_until_ready(loss_tiled)

    # Default (auto-sized tile) path.
    loss_full = calc_kg_loss(entities, relations, W_R, kg_lambda,
                             h_idx, r_idx, pos_idx, neg_idx)
    loss_full = jax.block_until_ready(loss_full)

    # Tolerance accommodates MXU f32 accumulation-order / pass differences vs
    # the XLA HIGHEST-precision reference; structural errors would be orders
    # of magnitude larger.
    assert jnp.allclose(loss_tiled, ref, atol=1e-3, rtol=1e-3), (loss_tiled, ref)
    assert jnp.allclose(loss_full, ref, atol=1e-3, rtol=1e-3), (loss_full, ref)
    assert jnp.allclose(loss_tiled, loss_full, atol=1e-4, rtol=1e-4), (loss_tiled, loss_full)

    print("KERNEL_OK")
</pallas_src>

<mosaic_0001>
module attributes {stable_mosaic.version = 11 : i64} {
  func.func @_kg_loss_kernel(%arg0: i32, %arg1: memref<14xi32, #tpu.memory_space<smem>>, %arg2: memref<14xi32, #tpu.memory_space<smem>>, %arg3: memref<8x32xf32, #tpu.memory_space<vmem>>, %arg4: memref<8x32xf32, #tpu.memory_space<vmem>>, %arg5: memref<8x32xf32, #tpu.memory_space<vmem>>, %arg6: memref<1x1x32xf32, #tpu.memory_space<vmem>>, %arg7: memref<1x32x32xf32, #tpu.memory_space<vmem>>, %arg8: memref<1x1x1xf32, #tpu.memory_space<vmem>>, %arg9: memref<1x1x1xf32, #tpu.memory_space<vmem>>) attributes {dimension_semantics = [#tpu.dimension_semantics<parallel>], iteration_bounds = array<i64: 14>, scalar_prefetch = 2 : i64, scratch_operands = 0 : i64, tpu.core_type = #tpu.core_type<tc>, window_params = [{transform_indices = @transform_0, window_bounds = array<i64: 8, 32>}, {transform_indices = @transform_1, window_bounds = array<i64: 8, 32>}, {transform_indices = @transform_2, window_bounds = array<i64: 8, 32>}, {transform_indices = @transform_3, window_bounds = array<i64: 1, 1, 32>}, {transform_indices = @transform_4, window_bounds = array<i64: 1, 32, 32>}, {transform_indices = @transform_5, window_bounds = array<i64: 1, 1, 1>}, {transform_indices = @transform_6, window_bounds = array<i64: 1, 1, 1>}]} {
    %0 = arith.index_cast %arg0 : i32 to index
    %1 = memref.load %arg2[%0] : memref<14xi32, #tpu.memory_space<smem>>
    %c0_i32 = arith.constant 0 : i32
    %2 = arith.cmpi eq, %1, %c0_i32 : i32
    %3 = arith.extui %2 : i1 to i32
    %c0_i32_0 = arith.constant 0 : i32
    %4 = arith.cmpi ne, %3, %c0_i32_0 : i32
    scf.if %4 {
      %cst = arith.constant 0.000000e+00 : f32
      %8 = vector.broadcast %cst : f32 to vector<1x1x1xf32>
      %c0 = arith.constant 0 : index
      %c0_3 = arith.constant 0 : index
      %c0_4 = arith.constant 0 : index
      %9 = vector.load %arg8[%c0, %c0_3, %c0_4] : memref<1x1x1xf32, #tpu.memory_space<vmem>>, vector<1x1x1xf32>
      tpu.vector_store %arg8[%c0, %c0_3, %c0_4], %8 {strides = array<i32>} : memref<1x1x1xf32, #tpu.memory_space<vmem>>, vector<1x1x1xf32>,
      %cst_5 = arith.constant 0.000000e+00 : f32
      %10 = vector.broadcast %cst_5 : f32 to vector<1x1x1xf32>
      %c0_6 = arith.constant 0 : index
      %c0_7 = arith.constant 0 : index
      %c0_8 = arith.constant 0 : index
      %11 = vector.load %arg9[%c0_6, %c0_7, %c0_8] : memref<1x1x1xf32, #tpu.memory_space<vmem>>, vector<1x1x1xf32>
      tpu.vector_store %arg9[%c0_6, %c0_7, %c0_8], %10 {strides = array<i32>} : memref<1x1x1xf32, #tpu.memory_space<vmem>>, vector<1x1x1xf32>,
    } else {
    }
    %c0_i32_1 = arith.constant 0 : i32
    %5 = arith.cmpi sgt, %1, %c0_i32_1 : i32
    %6 = arith.extui %5 : i1 to i32
    %c0_i32_2 = arith.constant 0 : i32
    %7 = arith.cmpi ne, %6, %c0_i32_2 : i32
    scf.if %7 {
      %c0 = arith.constant 0 : index
      %c0_3 = arith.constant 0 : index
      %c0_4 = arith.constant 0 : index
      %8 = vector.load %arg7[%c0, %c0_3, %c0_4] : memref<1x32x32xf32, #tpu.memory_space<vmem>>, vector<1x32x32xf32>
      %9 = vector.shape_cast %8 : vector<1x32x32xf32> to vector<32x32xf32>
      %c0_5 = arith.constant 0 : index
      %c0_6 = arith.constant 0 : index
      %c0_7 = arith.constant 0 : index
      %10 = vector.load %arg6[%c0_5, %c0_6, %c0_7] : memref<1x1x32xf32, #tpu.memory_space<vmem>>, vector<1x1x32xf32>
      %11 = vector.shape_cast %10 : vector<1x1x32xf32> to vector<1x32xf32>
      %c0_8 = arith.constant 0 : index
      %c0_9 = arith.constant 0 : index
      %12 = vector.load %arg3[%c0_8, %c0_9] : memref<8x32xf32, #tpu.memory_space<vmem>>, vector<8x32xf32>
      %c0_10 = arith.constant 0 : index
      %c0_11 = arith.constant 0 : index
      %13 = vector.load %arg4[%c0_10, %c0_11] : memref<8x32xf32, #tpu.memory_space<vmem>>, vector<8x32xf32>
      %c0_12 = arith.constant 0 : index
      %c0_13 = arith.constant 0 : index
      %14 = vector.load %arg5[%c0_12, %c0_13] : memref<8x32xf32, #tpu.memory_space<vmem>>, vector<8x32xf32>
      %cst = arith.constant dense<0.000000e+00> : vector<8x32xf32>
      %15 = tpu.matmul %12, %9, %cst {dimension_numbers = #tpu.dot_dimension_numbers<[1], [0], [0], [1], [0, 0, 1, 1], [], []>} : vector<8x32xf32>, vector<32x32xf32>, vector<8x32xf32> -> vector<8x32xf32>
      %cst_14 = arith.constant dense<0.000000e+00> : vector<8x32xf32>
      %16 = tpu.matmul %13, %9, %cst_14 {dimension_numbers = #tpu.dot_dimension_numbers<[1], [0], [0], [1], [0, 0, 1, 1], [], []>} : vector<8x32xf32>, vector<32x32xf32>, vector<8x32xf32> -> vector<8x32xf32>
      %cst_15 = arith.constant dense<0.000000e+00> : vector<8x32xf32>
      %17 = tpu.matmul %14, %9, %cst_15 {dimension_numbers = #tpu.dot_dimension_numbers<[1], [0], [0], [1], [0, 0, 1, 1], [], []>} : vector<8x32xf32>, vector<32x32xf32>, vector<8x32xf32> -> vector<8x32xf32>
      %18 = vector.broadcast %11 : vector<1x32xf32> to vector<8x32xf32>
      %19 = arith.addf %15, %18 : vector<8x32xf32>
      %20 = arith.subf %19, %16 : vector<8x32xf32>
      %21 = arith.mulf %20, %20 : vector<8x32xf32>
      %cst_16 = arith.constant dense<0.000000e+00> : vector<8xf32>
      %22 = vector.multi_reduction <add>, %21, %cst_16 [1] : vector<8x32xf32> to vector<8xf32>
      %23 = vector.shape_cast %22 : vector<8xf32> to vector<8x1xf32>
      %24 = arith.subf %19, %17 : vector<8x32xf32>
      %25 = arith.mulf %24, %24 : vector<8x32xf32>
      %cst_17 = arith.constant dense<0.000000e+00> : vector<8xf32>
      %26 = vector.multi_reduction <add>, %25, %cst_17 [1] : vector<8x32xf32> to vector<8xf32>
      %27 = vector.shape_cast %26 : vector<8xf32> to vector<8x1xf32>
      %28 = arith.subf %27, %23 : vector<8x1xf32>
      %cst_18 = arith.constant 0.000000e+00 : f32
      %29 = vector.broadcast %cst_18 : f32 to vector<8x1xf32>
      %30 = arith.subf %29, %28 : vector<8x1xf32>
      %cst_19 = arith.constant 0.000000e+00 : f32
      %31 = vector.broadcast %cst_19 : f32 to vector<8x1xf32>
      %32 = arith.maximumf %30, %31 : vector<8x1xf32>
      %33 = math.absf %28 : vector<8x1xf32>
      %cst_20 = arith.constant 0.000000e+00 : f32
      %34 = vector.broadcast %cst_20 : f32 to vector<8x1xf32>
      %35 = arith.subf %34, %33 : vector<8x1xf32>
      %36 = math.exp %35 : vector<8x1xf32>
      %cst_21 = arith.constant 1.000000e+00 : f32
      %37 = vector.broadcast %cst_21 : f32 to vector<8x1xf32>
      %38 = arith.addf %37, %36 : vector<8x1xf32>
      %39 = math.log %38 : vector<8x1xf32>
      %40 = arith.addf %32, %39 : vector<8x1xf32>
      %41 = arith.mulf %11, %11 : vector<1x32xf32>
      %cst_22 = arith.constant dense<0.000000e+00> : vector<1xf32>
      %42 = vector.multi_reduction <add>, %41, %cst_22 [1] : vector<1x32xf32> to vector<1xf32>
      %43 = vector.shape_cast %42 : vector<1xf32> to vector<1x1xf32>
      %44 = arith.mulf %15, %15 : vector<8x32xf32>
      %45 = arith.mulf %16, %16 : vector<8x32xf32>
      %46 = arith.addf %44, %45 : vector<8x32xf32>
      %47 = arith.mulf %17, %17 : vector<8x32xf32>
      %48 = arith.addf %46, %47 : vector<8x32xf32>
      %cst_23 = arith.constant dense<0.000000e+00> : vector<8xf32>
      %49 = vector.multi_reduction <add>, %48, %cst_23 [1] : vector<8x32xf32> to vector<8xf32>
      %50 = vector.shape_cast %49 : vector<8xf32> to vector<8x1xf32>
      %51 = vector.broadcast %43 : vector<1x1xf32> to vector<8x1xf32>
      %52 = arith.addf %50, %51 : vector<8x1xf32>
      %cst_24 = arith.constant 5.000000e-01 : f32
      %53 = vector.broadcast %cst_24 : f32 to vector<8x1xf32>
      %54 = arith.mulf %53, %52 : vector<8x1xf32>
      %55 = tpu.iota {dimensions = array<i32: 0>} : vector<8x1xi32>
      %56 = vector.broadcast %1 : i32 to vector<8x1xi32>
      %57 = arith.cmpi slt, %55, %56 : vector<8x1xi32>
      %58 = arith.extui %57 : vector<8x1xi1> to vector<8x1xi32>
      %59 = arith.sitofp %58 : vector<8x1xi32> to vector<8x1xf32>
      %60 = arith.mulf %40, %59 : vector<8x1xf32>
      %cst_25 = arith.constant dense<0.000000e+00> : vector<1xf32>
      %61 = vector.multi_reduction <add>, %60, %cst_25 [0] : vector<8x1xf32> to vector<1xf32>
      %62 = vector.shape_cast %61 : vector<1xf32> to vector<1x1xf32>
      %63 = vector.shape_cast %62 : vector<1x1xf32> to vector<1x1x1xf32>
      %c0_26 = arith.constant 0 : index
      %c0_27 = arith.constant 0 : index
      %c0_28 = arith.constant 0 : index
      %64 = vector.load %arg8[%c0_26, %c0_27, %c0_28] : memref<1x1x1xf32, #tpu.memory_space<vmem>>, vector<1x1x1xf32>
      tpu.vector_store %arg8[%c0_26, %c0_27, %c0_28], %63 {strides = array<i32>} : memref<1x1x1xf32, #tpu.memory_space<vmem>>, vector<1x1x1xf32>,
      %65 = arith.mulf %54, %59 : vector<8x1xf32>
      %cst_29 = arith.constant dense<0.000000e+00> : vector<1xf32>
      %66 = vector.multi_reduction <add>, %65, %cst_29 [0] : vector<8x1xf32> to vector<1xf32>
      %67 = vector.shape_cast %66 : vector<1xf32> to vector<1x1xf32>
      %68 = vector.shape_cast %67 : vector<1x1xf32> to vector<1x1x1xf32>
      %c0_30 = arith.constant 0 : index
      %c0_31 = arith.constant 0 : index
      %c0_32 = arith.constant 0 : index
      %69 = vector.load %arg9[%c0_30, %c0_31, %c0_32] : memref<1x1x1xf32, #tpu.memory_space<vmem>>, vector<1x1x1xf32>
      tpu.vector_store %arg9[%c0_30, %c0_31, %c0_32], %68 {strides = array<i32>} : memref<1x1x1xf32, #tpu.memory_space<vmem>>, vector<1x1x1xf32>,
    } else {
    }
    return
  }
  func.func @transform_0(%arg0: i32, %arg1: memref<14xi32, #tpu.memory_space<smem>>, %arg2: memref<14xi32, #tpu.memory_space<smem>>) -> (i32, i32) {
    %c0_i32 = arith.constant 0 : i32
    %c0_i32_0 = arith.constant 0 : i32
    return %arg0, %c0_i32 : i32, i32
  }
  func.func @transform_1(%arg0: i32, %arg1: memref<14xi32, #tpu.memory_space<smem>>, %arg2: memref<14xi32, #tpu.memory_space<smem>>) -> (i32, i32) {
    %c0_i32 = arith.constant 0 : i32
    %c0_i32_0 = arith.constant 0 : i32
    return %arg0, %c0_i32 : i32, i32
  }
  func.func @transform_2(%arg0: i32, %arg1: memref<14xi32, #tpu.memory_space<smem>>, %arg2: memref<14xi32, #tpu.memory_space<smem>>) -> (i32, i32) {
    %c0_i32 = arith.constant 0 : i32
    %c0_i32_0 = arith.constant 0 : i32
    return %arg0, %c0_i32 : i32, i32
  }
  func.func @transform_3(%arg0: i32, %arg1: memref<14xi32, #tpu.memory_space<smem>>, %arg2: memref<14xi32, #tpu.memory_space<smem>>) -> (i32, i32, i32) {
    %0 = arith.index_cast %arg0 : i32 to index
    %1 = memref.load %arg1[%0] : memref<14xi32, #tpu.memory_space<smem>>
    %c0_i32 = arith.constant 0 : i32
    %c0_i32_0 = arith.constant 0 : i32
    %c0_i32_1 = arith.constant 0 : i32
    return %1, %c0_i32, %c0_i32_0 : i32, i32, i32
  }
  func.func @transform_4(%arg0: i32, %arg1: memref<14xi32, #tpu.memory_space<smem>>, %arg2: memref<14xi32, #tpu.memory_space<smem>>) -> (i32, i32, i32) {
    %0 = arith.index_cast %arg0 : i32 to index
    %1 = memref.load %arg1[%0] : memref<14xi32, #tpu.memory_space<smem>>
    %c0_i32 = arith.constant 0 : i32
    %c0_i32_0 = arith.constant 0 : i32
    %c0_i32_1 = arith.constant 0 : i32
    return %1, %c0_i32, %c0_i32_0 : i32, i32, i32
  }
  func.func @transform_5(%arg0: i32, %arg1: memref<14xi32, #tpu.memory_space<smem>>, %arg2: memref<14xi32, #tpu.memory_space<smem>>) -> (i32, i32, i32) {
    %c0_i32 = arith.constant 0 : i32
    %c0_i32_0 = arith.constant 0 : i32
    %c0_i32_1 = arith.constant 0 : i32
    return %arg0, %c0_i32, %c0_i32_0 : i32, i32, i32
  }
  func.func @transform_6(%arg0: i32, %arg1: memref<14xi32, #tpu.memory_space<smem>>, %arg2: memref<14xi32, #tpu.memory_space<smem>>) -> (i32, i32, i32) {
    %c0_i32 = arith.constant 0 : i32
    %c0_i32_0 = arith.constant 0 : i32
    %c0_i32_1 = arith.constant 0 : i32
    return %arg0, %c0_i32, %c0_i32_0 : i32, i32, i32
  }
}

</mosaic_0001>

<llo_original>
// kernel: calc_kg_loss.1
$region0: #{calc_kg_loss.1}
  #allocation0 [shape = 'u32[]', space=smem, size = 0x4, offset = 0x4, fixed_abs, tag = 'smem constant byte address 0x4 - core index']
  #allocation1 [shape = 'u32[144,128]{1,0:T(1,128)}', space=vmem, size = 0x12000, scoped, tag = 'internal scratch']
  #allocation2 [shape = 's32[1]{0}', space=sflag, size = 0x4, scoped, tag = 'scoped memory for calc_kg_loss.1']
  #allocation3 [shape = 'u8[512]{0}', space=smem, size = 0x200, scoped, tag = 'prefetched SMEM operand 0']
  #allocation4 [shape = 'u8[512]{0}', space=smem, size = 0x200, scoped, tag = 'prefetched SMEM operand 1']
  %s0 = inlined_call_operand.vmem [shape: s32[14], index: 0, kind: input, shape index: {}]
  %s1 = inlined_call_operand.vmem [shape: s32[14], index: 1, kind: input, shape index: {}]
  %s2 = inlined_call_operand.vmem [shape: f32[112,32], index: 2, kind: input, shape index: {}]
  %s3 = inlined_call_operand.vmem [shape: f32[112,32], index: 3, kind: input, shape index: {}]
  %s4 = inlined_call_operand.vmem [shape: f32[112,32], index: 4, kind: input, shape index: {}]
  %s5 = inlined_call_operand.vmem [shape: f32[11,1,32], index: 5, kind: input, shape index: {}]
  %s6 = inlined_call_operand.vmem [shape: f32[11,32,32], index: 6, kind: input, shape index: {}]
  %s7 = inlined_call_operand.vmem [shape: f32[14,1,1], index: 7, kind: output, shape index: {0}]
  %s8 = inlined_call_operand.vmem [shape: f32[14,1,1], index: 8, kind: output, shape index: {1}]
  %9 = xla_tuple %s7, %s8
  %s10 = sld [smem:[#allocation0]]
  $region69: #{calc_kg_loss.1} parent=0
    _
  %s12 = ssub.s32 1, %s10
  %s13 = scalar_select 0, %s12, %s10
  %s14 = sshll.u32 %s0, 4
  %s15 = int_to_ptr.vmem [resolvable:$true] %s14
  %17 = dma.vmem_to_smem %s15, 16, [#allocation3], [#allocation2]
  %s18 = sshll.u32 %s1, 4
  %s19 = int_to_ptr.vmem [resolvable:$true] %s18
  %21 = dma.vmem_to_smem %s19, 16, [#allocation4], [#allocation2]
  %22 = dma.done [#allocation2], 32
  %23 = sfence
  loop: start=0, step=1, limit=16
  $region2: #{calc_kg_loss.1} parent=0 // loop_pre_header
    _
  $region3: #{calc_kg_loss.1} parent=0 // loop_header
    %s25 = sphi 0, %s29
    %p26 = scmp.ge.s32.totalorder %s25, 16
    %s35 = sphi 0, %s37
    %s38 = sphi 0, %s35
    %s39 = sphi 0, %s38
    %s55 = sphi 0, %s39
    %s61 = sphi 0, %s63
    %s64 = sphi 0, %s61
    %s65 = sphi 0, %s64
    %s81 = sphi 0, %s65
    %s87 = sphi 0, %s89
    %s90 = sphi 0, %s87
    %s91 = sphi 0, %s90
    %s107 = sphi 0, %s91
    %s115 = sphi 0, %s117
    %s118 = sphi 0, %s115
    %s119 = sphi 0, %s118
    %s135 = sphi 0, %s119
    %s143 = sphi 0, %s145
    %s146 = sphi 0, %s143
    %s147 = sphi 0, %s146
    %s163 = sphi 0, %s147
    %s169 = sphi 0, %s171
    %s172 = sphi 0, %s169
    %s173 = sphi 0, %s172
    %s189 = sphi 0, %s173
    %s195 = sphi 0, %s197
    %s198 = sphi 0, %s195
    %s199 = sphi 0, %s198
    %s215 = sphi 0, %s199
  $region4: #{calc_kg_loss.1} parent=0 // loop_header_branch
    %28 = sbr.rel (%p26) target = $region8
  $region5: #{calc_kg_loss.1} parent=0 // loop_body
    %s30 = ssub.s32 %s25, 1
    %s31 = ssub.s32 %s25, 2
    %s32 = sadd.s32 %s25, 1
    %s33 = ssub.s32 %s25, %s32
    %p34 = scmp.eq.s32.totalorder %s33, 0
    %s36 = sadd.s32 %s35, 1
    %s37 = scalar_select %p34, %s35, %s36
    %p40 = pneg %p34
    %p41 = scmp.eq.s32.totalorder %s25, 13
    %p42 = por %p40, %p41
    %p43 = scmp.ne.s32.totalorder %s35, %s38
    %p44 = scmp.eq.s32.totalorder %s25, 0
    %p45 = por %p43, %p44
    %p46 = scmp.ne.s32.totalorder %s35, %s38
    %p47 = scmp.eq.s32.totalorder %s30, 13
    %p48 = por %p46, %p47
    %p49 = scmp.ne.s32.totalorder %s38, %s39
    %p50 = scmp.eq.s32.totalorder %s30, 0
    %p51 = por %p49, %p50
    %p52 = scmp.ne.s32.totalorder %s38, %s39
    %p53 = scmp.eq.s32.totalorder %s31, 13
    %p54 = por %p52, %p53
    %p56 = scmp.ne.s32.totalorder %s39, %s55
    %p57 = scmp.eq.s32.totalorder %s31, 0
    %p58 = por %p56, %p57
    %s59 = ssub.s32 %s25, %s32
    %p60 = scmp.eq.s32.totalorder %s59, 0
    %s62 = sadd.s32 %s61, 1
    %s63 = scalar_select %p60, %s61, %s62
    %p66 = pneg %p60
    %p67 = scmp.eq.s32.totalorder %s25, 13
    %p68 = por %p66, %p67
    %p69 = scmp.ne.s32.totalorder %s61, %s64
    %p70 = scmp.eq.s32.totalorder %s25, 0
    %p71 = por %p69, %p70
    %p72 = scmp.ne.s32.totalorder %s61, %s64
    %p73 = scmp.eq.s32.totalorder %s30, 13
    %p74 = por %p72, %p73
    %p75 = scmp.ne.s32.totalorder %s64, %s65
    %p76 = scmp.eq.s32.totalorder %s30, 0
    %p77 = por %p75, %p76
    %p78 = scmp.ne.s32.totalorder %s64, %s65
    %p79 = scmp.eq.s32.totalorder %s31, 13
    %p80 = por %p78, %p79
    %p82 = scmp.ne.s32.totalorder %s65, %s81
    %p83 = scmp.eq.s32.totalorder %s31, 0
    %p84 = por %p82, %p83
    %s85 = ssub.s32 %s25, %s32
    %p86 = scmp.eq.s32.totalorder %s85, 0
    %s88 = sadd.s32 %s87, 1
    %s89 = scalar_select %p86, %s87, %s88
    %p92 = pneg %p86
    %p93 = scmp.eq.s32.totalorder %s25, 13
    %p94 = por %p92, %p93
    %p95 = scmp.ne.s32.totalorder %s87, %s90
    %p96 = scmp.eq.s32.totalorder %s25, 0
    %p97 = por %p95, %p96
    %p98 = scmp.ne.s32.totalorder %s87, %s90
    %p99 = scmp.eq.s32.totalorder %s30, 13
    %p100 = por %p98, %p99
    %p101 = scmp.ne.s32.totalorder %s90, %s91
    %p102 = scmp.eq.s32.totalorder %s30, 0
    %p103 = por %p101, %p102
    %p104 = scmp.ne.s32.totalorder %s90, %s91
    %p105 = scmp.eq.s32.totalorder %s31, 13
    %p106 = por %p104, %p105
    %p108 = scmp.ne.s32.totalorder %s91, %s107
    %p109 = scmp.eq.s32.totalorder %s31, 0
    %p110 = por %p108, %p109
    %s111 = sld [smem:[#allocation3 + %s25]]
    %s112 = sld [smem:[#allocation3 + %s32]]
    %s113 = ssub.s32 %s111, %s112
    %p114 = scmp.eq.s32.totalorder %s113, 0
    %s116 = sadd.s32 %s115, 1
    %s117 = scalar_select %p114, %s115, %s116
    %p120 = pneg %p114
    %p121 = scmp.eq.s32.totalorder %s25, 13
    %p122 = por %p120, %p121
    %p123 = scmp.ne.s32.totalorder %s115, %s118
    %p124 = scmp.eq.s32.totalorder %s25, 0
    %p125 = por %p123, %p124
    %p126 = scmp.ne.s32.totalorder %s115, %s118
    %p127 = scmp.eq.s32.totalorder %s30, 13
    %p128 = por %p126, %p127
    %p129 = scmp.ne.s32.totalorder %s118, %s119
    %p130 = scmp.eq.s32.totalorder %s30, 0
    %p131 = por %p129, %p130
    %p132 = scmp.ne.s32.totalorder %s118, %s119
    %p133 = scmp.eq.s32.totalorder %s31, 13
    %p134 = por %p132, %p133
    %p136 = scmp.ne.s32.totalorder %s119, %s135
    %p137 = scmp.eq.s32.totalorder %s31, 0
    %p138 = por %p136, %p137
    %s139 = sld [smem:[#allocation3 + %s25]]
    %s140 = sld [smem:[#allocation3 + %s32]]
    %s141 = ssub.s32 %s139, %s140
    %p142 = scmp.eq.s32.totalorder %s141, 0
    %s144 = sadd.s32 %s143, 1
    %s145 = scalar_select %p142, %s143, %s144
    %p148 = pneg %p142
    %p149 = scmp.eq.s32.totalorder %s25, 13
    %p150 = por %p148, %p149
    %p151 = scmp.ne.s32.totalorder %s143, %s146
    %p152 = scmp.eq.s32.totalorder %s25, 0
    %p153 = por %p151, %p152
    %p154 = scmp.ne.s32.totalorder %s143, %s146
    %p155 = scmp.eq.s32.totalorder %s30, 13
    %p156 = por %p154, %p155
    %p157 = scmp.ne.s32.totalorder %s146, %s147
    %p158 = scmp.eq.s32.totalorder %s30, 0
    %p159 = por %p157, %p158
    %p160 = scmp.ne.s32.totalorder %s146, %s147
    %p161 = scmp.eq.s32.totalorder %s31, 13
    %p162 = por %p160, %p161
    %p164 = scmp.ne.s32.totalorder %s147, %s163
    %p165 = scmp.eq.s32.totalorder %s31, 0
    %p166 = por %p164, %p165
    %s167 = ssub.s32 %s25, %s32
    %p168 = scmp.eq.s32.totalorder %s167, 0
    %s170 = sadd.s32 %s169, 1
    %s171 = scalar_select %p168, %s169, %s170
    %p174 = pneg %p168
    %p175 = scmp.eq.s32.totalorder %s25, 13
    %p176 = por %p174, %p175
    %p177 = scmp.ne.s32.totalorder %s169, %s172
    %p178 = scmp.eq.s32.totalorder %s25, 0
    %p179 = por %p177, %p178
    %p180 = scmp.ne.s32.totalorder %s169, %s172
    %p181 = scmp.eq.s32.totalorder %s30, 13
    %p182 = por %p180, %p181
    %p183 = scmp.ne.s32.totalorder %s172, %s173
    %p184 = scmp.eq.s32.totalorder %s30, 0
    %p185 = por %p183, %p184
    %p186 = scmp.ne.s32.totalorder %s172, %s173
    %p187 = scmp.eq.s32.totalorder %s31, 13
    %p188 = por %p186, %p187
    %p190 = scmp.ne.s32.totalorder %s173, %s189
    %p191 = scmp.eq.s32.totalorder %s31, 0
    %p192 = por %p190, %p191
    %s193 = ssub.s32 %s25, %s32
    %p194 = scmp.eq.s32.totalorder %s193, 0
    %s196 = sadd.s32 %s195, 1
    %s197 = scalar_select %p194, %s195, %s196
    %p200 = pneg %p194
    %p201 = scmp.eq.s32.totalorder %s25, 13
    %p202 = por %p200, %p201
    %p203 = scmp.ne.s32.totalorder %s195, %s198
    %p204 = scmp.eq.s32.totalorder %s25, 0
    %p205 = por %p203, %p204
    %p206 = scmp.ne.s32.totalorder %s195, %s198
    %p207 = scmp.eq.s32.totalorder %s30, 13
    %p208 = por %p206, %p207
    %p209 = scmp.ne.s32.totalorder %s198, %s199
    %p210 = scmp.eq.s32.totalorder %s30, 0
    %p211 = por %p209, %p210
    %p212 = scmp.ne.s32.totalorder %s198, %s199
    %p213 = scmp.eq.s32.totalorder %s31, 13
    %p214 = por %p212, %p213
    %p216 = scmp.ne.s32.totalorder %s199, %s215
    %p217 = scmp.eq.s32.totalorder %s31, 0
    %p218 = por %p216, %p217
    %p219 = scmp.le.s32.totalorder 1, %s25
    %p220 = scmp.lt.s32.totalorder %s25, 15
    %p221 = pnand %p219, %p220
    %p222 = pneg %p221
    // Predicated region
    $region9: #{calc_kg_loss.1} parent=5 // pred_check
      _
    $region10: #{calc_kg_loss.1} parent=5 // pred_check_branch
      %224 = sbr.rel (%p221) target = $region12
    $region11: #{calc_kg_loss.1} parent=5 // pred_region
      %s225 = ssub.s32 %s25, 1
    $region12: #{calc_kg_loss.1} parent=5 // pred_fallthru
      _
    %p226 = scmp.lt.s32.totalorder %s25, 14
    // Predicated region
    $region13: #{calc_kg_loss.1} parent=5 // pred_check
      %p227 = pneg %p226
    $region14: #{calc_kg_loss.1} parent=5 // pred_check_branch
      %229 = sbr.rel (%p227) target = $region16
    $region15: #{calc_kg_loss.1} parent=5 // pred_region
      // Predicated region
      $region17: #{calc_kg_loss.1} parent=15 // pred_check
        %p230 = pneg %p45
      $region18: #{calc_kg_loss.1} parent=15 // pred_check_branch
        %232 = sbr.rel (%p230) target = $region20
      $region19: #{calc_kg_loss.1} parent=15 // pred_region
        %p233 = scmp.lt.s32.totalorder %s25, 13
        %s234 = scalar_select %p233, %s25, 13
        %s235 = smul.addr %s234, 8
        %s236 = scalar_lea.vmem %s2, %s235
      $region20: #{calc_kg_loss.1} parent=15 // pred_fallthru
        _
      // Predicated region
      $region21: #{calc_kg_loss.1} parent=15 // pred_check
        %p237 = pneg %p71
      $region22: #{calc_kg_loss.1} parent=15 // pred_check_branch
        %239 = sbr.rel (%p237) target = $region24
      $region23: #{calc_kg_loss.1} parent=15 // pred_region
        %p240 = scmp.lt.s32.totalorder %s25, 13
        %s241 = scalar_select %p240, %s25, 13
        %s242 = smul.addr %s241, 8
        %s243 = scalar_lea.vmem %s3, %s242
      $region24: #{calc_kg_loss.1} parent=15 // pred_fallthru
        _
      // Predicated region
      $region25: #{calc_kg_loss.1} parent=15 // pred_check
        %p244 = pneg %p97
      $region26: #{calc_kg_loss.1} parent=15 // pred_check_branch
        %246 = sbr.rel (%p244) target = $region28
      $region27: #{calc_kg_loss.1} parent=15 // pred_region
        %p247 = scmp.lt.s32.totalorder %s25, 13
        %s248 = scalar_select %p247, %s25, 13
        %s249 = smul.addr %s248, 8
        %s250 = scalar_lea.vmem %s4, %s249
      $region28: #{calc_kg_loss.1} parent=15 // pred_fallthru
        _
      // Predicated region
      $region29: #{calc_kg_loss.1} parent=15 // pred_check
        %p251 = pneg %p125
      $region30: #{calc_kg_loss.1} parent=15 // pred_check_branch
        %253 = sbr.rel (%p251) target = $region32
      $region31: #{calc_kg_loss.1} parent=15 // pred_region
        %s254 = sld [smem:[#allocation3 + %s25]]
        %p255 = scmp.lt.s32.totalorder %s254, 10
        %s256 = scalar_select %p255, %s254, 10
        %s257 = scalar_lea.vmem %s5, %s256
        %s258 = sld [smem:[#allocation3 + %s25]]
      $region32: #{calc_kg_loss.1} parent=15 // pred_fallthru
        _
      // Predicated region
      $region33: #{calc_kg_loss.1} parent=15 // pred_check
        %p259 = pneg %p153
      $region34: #{calc_kg_loss.1} parent=15 // pred_check_branch
        %261 = sbr.rel (%p259) target = $region36
      $region35: #{calc_kg_loss.1} parent=15 // pred_region
        %s262 = sld [smem:[#allocation3 + %s25]]
        %p263 = scmp.lt.s32.totalorder %s262, 10
        %s264 = scalar_select %p263, %s262, 10
        %s265 = smul.addr %s264, 4
        %s266 = smul.addr %s265, 8
        %s267 = scalar_lea.vmem %s6, %s266
        %s268 = sld [smem:[#allocation3 + %s25]]
      $region36: #{calc_kg_loss.1} parent=15 // pred_fallthru
        _
    $region16: #{calc_kg_loss.1} parent=5 // pred_fallthru
      _
    %p269 = scmp.le.s32.totalorder 1, %s25
    %p270 = scmp.lt.s32.totalorder %s25, 15
    %p271 = pnand %p269, %p270
    %p272 = pneg %p271
    // Predicated region
    $region37: #{calc_kg_loss.1} parent=5 // pred_check
      _
    $region38: #{calc_kg_loss.1} parent=5 // pred_check_branch
      %274 = sbr.rel (%p271) target = $region40
    $region39: #{calc_kg_loss.1} parent=5 // pred_region
      %s275 = ssub.s32 %s25, 1
      %p276 = scmp.lt.s32.totalorder %s30, 13
      %s277 = scalar_select %p276, %s30, 13
      %s278 = smul.addr %s277, 8
      %s279 = scalar_lea.vmem %s2, %s278
      %p280 = pneg %p51
      %p281 = pneg %p48
      %p282 = scmp.lt.s32.totalorder %s30, 13
      %s283 = scalar_select %p282, %s30, 13
      %s284 = smul.addr %s283, 8
      %s285 = scalar_lea.vmem %s3, %s284
      %p286 = pneg %p77
      %p287 = pneg %p74
      %p288 = scmp.lt.s32.totalorder %s30, 13
      %s289 = scalar_select %p288, %s30, 13
      %s290 = smul.addr %s289, 8
      %s291 = scalar_lea.vmem %s4, %s290
      %p292 = pneg %p103
      %p293 = pneg %p100
      %s294 = sld [smem:[#allocation3 + %s30]]
      %p295 = scmp.lt.s32.totalorder %s294, 10
      %s296 = scalar_select %p295, %s294, 10
      %s297 = scalar_lea.vmem %s5, %s296
      %p298 = pneg %p131
      %p299 = pneg %p128
      %s300 = sld [smem:[#allocation3 + %s30]]
      %p301 = scmp.lt.s32.totalorder %s300, 10
      %s302 = scalar_select %p301, %s300, 10
      %s303 = smul.addr %s302, 4
      %s304 = smul.addr %s303, 8
      %s305 = scalar_lea.vmem %s6, %s304
      %p306 = pneg %p159
      %p307 = pneg %p156
      %p308 = pneg %p185
      %p309 = pneg %p182
      %p310 = scmp.lt.s32.totalorder %s30, 13
      %s311 = scalar_select %p310, %s30, 13
      %s312 = scalar_lea.vmem %s7, %s311
      %p313 = pneg %p211
      %p314 = pneg %p208
      %p315 = scmp.lt.s32.totalorder %s30, 13
      %s316 = scalar_select %p315, %s30, 13
      %s317 = scalar_lea.vmem %s8, %s316
      %p318 = scmp.lt.s32.totalorder %s30, 13
      %s319 = scalar_select %p318, %s30, 13
      %s320 = smul.addr %s319, 8
      %s321 = scalar_lea.vmem %s2, %s320
      %p322 = scmp.lt.s32.totalorder %s30, 13
      %s323 = scalar_select %p322, %s30, 13
      %s324 = smul.addr %s323, 8
      %s325 = scalar_lea.vmem %s3, %s324
      %p326 = scmp.lt.s32.totalorder %s30, 13
      %s327 = scalar_select %p326, %s30, 13
      %s328 = smul.addr %s327, 8
      %s329 = scalar_lea.vmem %s4, %s328
      %s330 = sld [smem:[#allocation3 + %s30]]
      %p331 = scmp.lt.s32.totalorder %s330, 10
      %s332 = scalar_select %p331, %s330, 10
      %s333 = scalar_lea.vmem %s5, %s332
      %s334 = sld [smem:[#allocation3 + %s30]]
      %s335 = sld [smem:[#allocation3 + %s30]]
      %p336 = scmp.lt.s32.totalorder %s335, 10
      %s337 = scalar_select %p336, %s335, 10
      %s338 = smul.addr %s337, 4
      %s339 = smul.addr %s338, 8
      %s340 = scalar_lea.vmem %s6, %s339
      %s341 = sld [smem:[#allocation3 + %s30]]
      %p342 = scmp.lt.s32.totalorder %s30, 13
      %s343 = scalar_select %p342, %s30, 13
      %s344 = scalar_lea.vmem %s7, %s343
      %p345 = scmp.lt.s32.totalorder %s30, 13
      %s346 = scalar_select %p345, %s30, 13
      %s347 = scalar_lea.vmem %s8, %s346
      %s348 = sld [smem:[#allocation4 + %s30]]
      %p349 = scmp.eq.s32.totalorder %s348, 0
      // Predicated region
      $region41: #{calc_kg_loss.1} parent=39 // pred_check
        %p350 = pneg %p349
      $region42: #{calc_kg_loss.1} parent=39 // pred_check_branch
        %352 = sbr.rel (%p350) target = $region44
      $region43: #{calc_kg_loss.1} parent=39 // pred_region
        %vm353 = vcmask 0
        %354 = vst.msk [vmem:[%s344] sm:$0x1] %vm353, 0.0
        %355 = vst.msk [vmem:[%s347] sm:$0x1] %vm353, 0.0
      $region44: #{calc_kg_loss.1} parent=39 // pred_fallthru
        _
      %p356 = scmp.gt.s32.totalorder %s348, 0
      // Predicated region
      $region45: #{calc_kg_loss.1} parent=39 // pred_check
        %p357 = pneg %p356
      $region46: #{calc_kg_loss.1} parent=39 // pred_check_branch
        %359 = sbr.rel (%p357) target = $region48
      $region47: #{calc_kg_loss.1} parent=39 // pred_region
        %v360 = vld [vmem:[%s340] sm:$0xff]
        %v361 = vld [vmem:[%s340 + $0x8] sm:$0xff]
        %v362 = vld [vmem:[%s340 + $0x10] sm:$0xff]
        %v363 = vld [vmem:[%s340 + $0x18] sm:$0xff]
        %v364 = vld [vmem:[%s333] sm:$0x1]
        %v365 = vld [vmem:[%s321] sm:$0xff]
        %v366 = vld [vmem:[%s325] sm:$0xff]
        %v367 = vld [vmem:[%s329] sm:$0xff]
        %vm368 = vcmask 261120
        %v370 = vsel %vm368, %v365, 0
        %372 = vmatprep.subr.mxu0 0.0
        %373 = vmatpush1.msra.mxu0 %v360
        %374 = vmatprep.subr.mxu0 0.0
        %375 = vmatpush1.msra.mxu0 %v361
        %376 = vmatprep.subr.mxu0 0.0
        %377 = vmatpush1.msra.mxu0 %v362
        %378 = vmatprep.subr.mxu0 0.0
        %379 = vmatpush1.msra.mxu0 %v363
        %380 = vmatprep.subr.mxu0 0.0
        %381 = vmatpush1.msra.mxu0 0.0
        %382 = vmatprep.subr.mxu0 0.0
        %383 = vmatpush1.msra.mxu0 0.0
        %384 = vmatprep.subr.mxu0 0.0
        %385 = vmatpush1.msra.mxu0 0.0
        %386 = vmatprep.subr.mxu0 0.0
        %387 = vmatpush1.msra.mxu0 0.0
        %388 = vmatprep.subr.mxu0 0.0
        %389 = vmatpush1.msra.mxu0 0.0
        %390 = vmatprep.subr.mxu0 0.0
        %391 = vmatpush1.msra.mxu0 0.0
        %392 = vmatprep.subr.mxu0 0.0
        %393 = vmatpush1.msra.mxu0 0.0
        %394 = vmatprep.subr.mxu0 0.0
        %395 = vmatpush1.msra.mxu0 0.0
        %396 = vmatprep.subr.mxu0 0.0
        %397 = vmatpush1.msra.mxu0 0.0
        %398 = vmatprep.subr.mxu0 0.0
        %399 = vmatpush1.msra.mxu0 0.0
        %400 = vmatprep.subr.mxu0 0.0
        %401 = vmatpush1.msra.mxu0 0.0
        %402 = vmatprep.subr.mxu0 0.0
        %403 = vmatpush1.msra.mxu0 0.0
        %404 = vmatprep.subr.mxu0 0.0
        %405 = vmatpush1.msra.mxu0 0.0
        %406 = vmatprep.subr.mxu0 0.0
        %407 = vmatpush1.msra.mxu0 0.0
        %408 = vmatprep.subr.mxu0 0.0
        %409 = vmatpush1.msra.mxu0 0.0
        %410 = vmatprep.subr.mxu0 0.0
        %411 = vmatpush1.msra.mxu0 0.0
        %412 = vmatprep.subr.mxu0 0.0
        %413 = vmatpush1.msra.mxu0 0.0
        %414 = vmatprep.subr.mxu0 0.0
        %415 = vmatpush1.msra.mxu0 0.0
        %416 = vmatprep.subr.mxu0 0.0
        %417 = vmatpush1.msra.mxu0 0.0
        %418 = vmatprep.subr.mxu0 0.0
        %419 = vmatpush1.msra.mxu0 0.0
        %420 = vmatprep.subr.mxu0 0.0
        %421 = vmatpush1.msra.mxu0 0.0
        %422 = vmatprep.subr.mxu0 0.0
        %423 = vmatpush1.msra.mxu0 0.0
        %424 = vmatprep.subr.mxu0 0.0
        %425 = vmatpush1.msra.mxu0 0.0
        %426 = vmatprep.subr.mxu0 0.0
        %427 = vmatpush1.msra.mxu0 0.0
        %428 = vmatprep.subr.mxu0 0.0
        %429 = vmatpush1.msra.mxu0 0.0
        %430 = vmatprep.subr.mxu0 0.0
        %431 = vmatpush1.msra.mxu0 0.0
        %432 = vmatprep.subr.mxu0 0.0
        %433 = vmatpush1.msra.mxu0 0.0
        %434 = vmatprep.subr.mxu0 0.0
        %435 = vmatpush1.msra.mxu0 0.0
        %436 = vmatprep.mubr.f32.mxu0 0.0
        %437 = vmatmul.mubr.f32.gmra.mrb[0].mxu0 %v370
        %v438 = vpop.f32.mrb[0].mxu0
        %v439 = vadd.f32 0.0, %v438
        %v440 = vpop.f32.mrb[0].mxu0
        %441 = vdwg.mxu0
        %v443 = vsel %vm368, %v366, 0
        %445 = vmatprep.subr.mxu0 0.0
        %446 = vmatpush1.msra.mxu0 %v360
        %447 = vmatprep.subr.mxu0 0.0
        %448 = vmatpush1.msra.mxu0 %v361
        %449 = vmatprep.subr.mxu0 0.0
        %450 = vmatpush1.msra.mxu0 %v362
        %451 = vmatprep.subr.mxu0 0.0
        %452 = vmatpush1.msra.mxu0 %v363
        %453 = vmatprep.subr.mxu0 0.0
        %454 = vmatpush1.msra.mxu0 0.0
        %455 = vmatprep.subr.mxu0 0.0
        %456 = vmatpush1.msra.mxu0 0.0
        %457 = vmatprep.subr.mxu0 0.0
        %458 = vmatpush1.msra.mxu0 0.0
        %459 = vmatprep.subr.mxu0 0.0
        %460 = vmatpush1.msra.mxu0 0.0
        %461 = vmatprep.subr.mxu0 0.0
        %462 = vmatpush1.msra.mxu0 0.0
        %463 = vmatprep.subr.mxu0 0.0
        %464 = vmatpush1.msra.mxu0 0.0
        %465 = vmatprep.subr.mxu0 0.0
        %466 = vmatpush1.msra.mxu0 0.0
        %467 = vmatprep.subr.mxu0 0.0
        %468 = vmatpush1.msra.mxu0 0.0
        %469 = vmatprep.subr.mxu0 0.0
        %470 = vmatpush1.msra.mxu0 0.0
        %471 = vmatprep.subr.mxu0 0.0
        %472 = vmatpush1.msra.mxu0 0.0
        %473 = vmatprep.subr.mxu0 0.0
        %474 = vmatpush1.msra.mxu0 0.0
        %475 = vmatprep.subr.mxu0 0.0
        %476 = vmatpush1.msra.mxu0 0.0
        %477 = vmatprep.subr.mxu0 0.0
        %478 = vmatpush1.msra.mxu0 0.0
        %479 = vmatprep.subr.mxu0 0.0
        %480 = vmatpush1.msra.mxu0 0.0
        %481 = vmatprep.subr.mxu0 0.0
        %482 = vmatpush1.msra.mxu0 0.0
        %483 = vmatprep.subr.mxu0 0.0
        %484 = vmatpush1.msra.mxu0 0.0
        %485 = vmatprep.subr.mxu0 0.0
        %486 = vmatpush1.msra.mxu0 0.0
        %487 = vmatprep.subr.mxu0 0.0
        %488 = vmatpush1.msra.mxu0 0.0
        %489 = vmatprep.subr.mxu0 0.0
        %490 = vmatpush1.msra.mxu0 0.0
        %491 = vmatprep.subr.mxu0 0.0
        %492 = vmatpush1.msra.mxu0 0.0
        %493 = vmatprep.subr.mxu0 0.0
        %494 = vmatpush1.msra.mxu0 0.0
        %495 = vmatprep.subr.mxu0 0.0
        %496 = vmatpush1.msra.mxu0 0.0
        %497 = vmatprep.subr.mxu0 0.0
        %498 = vmatpush1.msra.mxu0 0.0
        %499 = vmatprep.subr.mxu0 0.0
        %500 = vmatpush1.msra.mxu0 0.0
        %501 = vmatprep.subr.mxu0 0.0
        %502 = vmatpush1.msra.mxu0 0.0
        %503 = vmatprep.subr.mxu0 0.0
        %504 = vmatpush1.msra.mxu0 0.0
        %505 = vmatprep.subr.mxu0 0.0
        %506 = vmatpush1.msra.mxu0 0.0
        %507 = vmatprep.subr.mxu0 0.0
        %508 = vmatpush1.msra.mxu0 0.0
        %509 = vmatprep.mubr.f32.mxu0 0.0
        %510 = vmatmul.mubr.f32.gmra.mrb[0].mxu0 %v443
        %v511 = vpop.f32.mrb[0].mxu0
        %v512 = vadd.f32 0.0, %v511
        %v513 = vpop.f32.mrb[0].mxu0
        %514 = vdwg.mxu0
        %v516 = vsel %vm368, %v367, 0
        %518 = vmatprep.subr.mxu0 0.0
        %519 = vmatpush1.msra.mxu0 %v360
        %520 = vmatprep.subr.mxu0 0.0
        %521 = vmatpush1.msra.mxu0 %v361
        %522 = vmatprep.subr.mxu0 0.0
        %523 = vmatpush1.msra.mxu0 %v362
        %524 = vmatprep.subr.mxu0 0.0
        %525 = vmatpush1.msra.mxu0 %v363
        %526 = vmatprep.subr.mxu0 0.0
        %527 = vmatpush1.msra.mxu0 0.0
        %528 = vmatprep.subr.mxu0 0.0
        %529 = vmatpush1.msra.mxu0 0.0
        %530 = vmatprep.subr.mxu0 0.0
        %531 = vmatpush1.msra.mxu0 0.0
        %532 = vmatprep.subr.mxu0 0.0
        %533 = vmatpush1.msra.mxu0 0.0
        %534 = vmatprep.subr.mxu0 0.0
        %535 = vmatpush1.msra.mxu0 0.0
        %536 = vmatprep.subr.mxu0 0.0
        %537 = vmatpush1.msra.mxu0 0.0
        %538 = vmatprep.subr.mxu0 0.0
        %539 = vmatpush1.msra.mxu0 0.0
        %540 = vmatprep.subr.mxu0 0.0
        %541 = vmatpush1.msra.mxu0 0.0
        %542 = vmatprep.subr.mxu0 0.0
        %543 = vmatpush1.msra.mxu0 0.0
        %544 = vmatprep.subr.mxu0 0.0
        %545 = vmatpush1.msra.mxu0 0.0
        %546 = vmatprep.subr.mxu0 0.0
        %547 = vmatpush1.msra.mxu0 0.0
        %548 = vmatprep.subr.mxu0 0.0
        %549 = vmatpush1.msra.mxu0 0.0
        %550 = vmatprep.subr.mxu0 0.0
        %551 = vmatpush1.msra.mxu0 0.0
        %552 = vmatprep.subr.mxu0 0.0
        %553 = vmatpush1.msra.mxu0 0.0
        %554 = vmatprep.subr.mxu0 0.0
        %555 = vmatpush1.msra.mxu0 0.0
        %556 = vmatprep.subr.mxu0 0.0
        %557 = vmatpush1.msra.mxu0 0.0
        %558 = vmatprep.subr.mxu0 0.0
        %559 = vmatpush1.msra.mxu0 0.0
        %560 = vmatprep.subr.mxu0 0.0
        %561 = vmatpush1.msra.mxu0 0.0
        %562 = vmatprep.subr.mxu0 0.0
        %563 = vmatpush1.msra.mxu0 0.0
        %564 = vmatprep.subr.mxu0 0.0
        %565 = vmatpush1.msra.mxu0 0.0
        %566 = vmatprep.subr.mxu0 0.0
        %567 = vmatpush1.msra.mxu0 0.0
        %568 = vmatprep.subr.mxu0 0.0
        %569 = vmatpush1.msra.mxu0 0.0
        %570 = vmatprep.subr.mxu0 0.0
        %571 = vmatpush1.msra.mxu0 0.0
        %572 = vmatprep.subr.mxu0 0.0
        %573 = vmatpush1.msra.mxu0 0.0
        %574 = vmatprep.subr.mxu0 0.0
        %575 = vmatpush1.msra.mxu0 0.0
        %576 = vmatprep.subr.mxu0 0.0
        %577 = vmatpush1.msra.mxu0 0.0
        %578 = vmatprep.subr.mxu0 0.0
        %579 = vmatpush1.msra.mxu0 0.0
        %580 = vmatprep.subr.mxu0 0.0
        %581 = vmatpush1.msra.mxu0 0.0
        %582 = vmatprep.mubr.f32.mxu0 0.0
        %583 = vmatmul.mubr.f32.gmra.mrb[0].mxu0 %v516
        %v584 = vpop.f32.mrb[0].mxu0
        %v585 = vadd.f32 0.0, %v584
        %v586 = vpop.f32.mrb[0].mxu0
        %587 = vdwg.mxu0
        %v589 = vlaneseq
        %v590 = vshrl.u32 %v589, 7
        %v591 = vsub.s32 0, %v590
        %v592 = vrot.slane %v364, %v591
        %v594 = vadd.f32 %v439, %v592
        %v595 = vsub.f32 %v594, %v512
        %v596 = vmul.f32 %v595, %v595
        %v597 = vsel %vm368, %v596, 0.0
        %598 = vadd.xlane.f32.xlu0 %v597
        %v599 = vpop.xlane.xlu0 %598
        %v600 = vsub.f32 %v594, %v585
        %v601 = vmul.f32 %v600, %v600
        %v602 = vsel %vm368, %v601, 0.0
        %603 = vadd.xlane.f32.xlu0 %v602
        %v604 = vpop.xlane.xlu0 %603
        %v605 = vsub.f32 %v604, %v599
        %v606 = vsub.f32 0.0, %v605
        %v607 = vmax.f32 %v606, 0.0
        %v608 = vand.u32 2147483647, %v605
        %v609 = vsub.f32 0.0, %v608
        %v610 = vmul.f32 %v609, 1.442695
        %v611 = vpow.pop %v610
        %v612 = vadd.f32 %v611, 1.0
        %v613 = vlog2.pop %v612
        %v614 = vmul.f32 %v613, 0.6931472
        %v615 = vadd.f32 %v607, %v614
        %v616 = vmul.f32 %v364, %v364
        %vm617 = vcmask 253952
        %v618 = vsel %vm617, %v616, 0.0
        %619 = vadd.xlane.f32.xlu0 %v618
        %v620 = vpop.xlane.xlu0 %619
        %v621 = vmul.f32 %v439, %v439
        %v622 = vmul.f32 %v512, %v512
        %v623 = vadd.f32 %v621, %v622
        %v624 = vmul.f32 %v585, %v585
        %v625 = vadd.f32 %v623, %v624
        %v626 = vsel %vm368, %v625, 0.0
        %627 = vadd.xlane.f32.xlu0 %v626
        %v628 = vpop.xlane.xlu0 %627
        %v629 = vlaneseq
        %v630 = vshrl.u32 %v629, 7
        %v631 = vsub.s32 0, %v630
        %v632 = vrot.slane %v620, %v631
        %v633 = vadd.f32 %v628, %v632
        %v634 = vmul.f32 %v633, 0.5
        %v635 = vlaneseq
        %v636 = vshrl.u32 %v635, 7
        %v637 = vstv %s348
        %vm638 = vcmp.lt.s32.totalorder %v636, %v637
        %v639 = vsel %vm638, 1, 0
        %v640 = vcvt.s32.f32 %v639
        %v641 = vmul.f32 %v615, %v640
        %v642 = vrot.slane %v641, 4
        %v643 = vadd.f32 %v641, %v642
        %v644 = vrot.slane %v643, 2
        %v645 = vadd.f32 %v643, %v644
        %v646 = vrot.slane %v645, 1
        %v647 = vadd.f32 %v645, %v646
        %vm648 = vcmask 0
        %649 = vst.msk [vmem:[%s344] sm:$0x1] %vm648, %v647
        %v650 = vmul.f32 %v634, %v640
        %v651 = vrot.slane %v650, 4
        %v652 = vadd.f32 %v650, %v651
        %v653 = vrot.slane %v652, 2
        %v654 = vadd.f32 %v652, %v653
        %v655 = vrot.slane %v654, 1
        %v656 = vadd.f32 %v654, %v655
        %657 = vst.msk [vmem:[%s347] sm:$0x1] %vm648, %v656
      $region48: #{calc_kg_loss.1} parent=39 // pred_fallthru
        _
      %p658 = scmp.lt.s32.totalorder %s30, 13
      %s659 = scalar_select %p658, %s30, 13
      %s660 = scalar_lea.vmem %s7, %s659
      %p661 = scmp.lt.s32.totalorder %s30, 13
      %s662 = scalar_select %p661, %s30, 13
      %s663 = scalar_lea.vmem %s8, %s662
      // Predicated region
      $region49: #{calc_kg_loss.1} parent=39 // pred_check
        %p664 = pneg %p182
      $region50: #{calc_kg_loss.1} parent=39 // pred_check_branch
        %666 = sbr.rel (%p664) target = $region52
      $region51: #{calc_kg_loss.1} parent=39 // pred_region
        _
      $region52: #{calc_kg_loss.1} parent=39 // pred_fallthru
        _
      // Predicated region
      $region53: #{calc_kg_loss.1} parent=39 // pred_check
        %p667 = pneg %p208
      $region54: #{calc_kg_loss.1} parent=39 // pred_check_branch
        %669 = sbr.rel (%p667) target = $region56
      $region55: #{calc_kg_loss.1} parent=39 // pred_region
        _
      $region56: #{calc_kg_loss.1} parent=39 // pred_fallthru
        _
    $region40: #{calc_kg_loss.1} parent=5 // pred_fallthru
      _
    %p670 = scmp.le.s32.totalorder 2, %s25
    // Predicated region
    $region57: #{calc_kg_loss.1} parent=5 // pred_check
      %p671 = pneg %p670
    $region58: #{calc_kg_loss.1} parent=5 // pred_check_branch
      %673 = sbr.rel (%p671) target = $region60
    $region59: #{calc_kg_loss.1} parent=5 // pred_region
      %s674 = ssub.s32 %s25, 2
      // Predicated region
      $region61: #{calc_kg_loss.1} parent=59 // pred_check
        %p675 = pneg %p188
      $region62: #{calc_kg_loss.1} parent=59 // pred_check_branch
        %677 = sbr.rel (%p675) target = $region64
      $region63: #{calc_kg_loss.1} parent=59 // pred_region
        %p678 = scmp.lt.s32.totalorder %s31, 13
        %s679 = scalar_select %p678, %s31, 13
        %s680 = scalar_lea.vmem %s7, %s679
      $region64: #{calc_kg_loss.1} parent=59 // pred_fallthru
        _
      // Predicated region
      $region65: #{calc_kg_loss.1} parent=59 // pred_check
        %p681 = pneg %p214
      $region66: #{calc_kg_loss.1} parent=59 // pred_check_branch
        %683 = sbr.rel (%p681) target = $region68
      $region67: #{calc_kg_loss.1} parent=59 // pred_region
        %p684 = scmp.lt.s32.totalorder %s31, 13
        %s685 = scalar_select %p684, %s31, 13
        %s686 = scalar_lea.vmem %s8, %s685
      $region68: #{calc_kg_loss.1} parent=59 // pred_fallthru
        _
    $region60: #{calc_kg_loss.1} parent=5 // pred_fallthru
      _
  $region6: #{calc_kg_loss.1} parent=0 // loop_footer
    %s29 = sadd.s32 1, %s25
  $region7: #{calc_kg_loss.1} parent=0 // loop_footer_branch
    %24 = sbr.rel target = $region3
  $region8: #{calc_kg_loss.1} parent=0 // loop_exit
    _

</llo_original>
